<compile_context>
chip_gen: v6e
topology: v6e:2x2x1
jax: 0.10.0
libtpu: 0.0.40
codegen_flags: <defaults>
</compile_context>

<pallas_src>
import jax
import jax.numpy as jnp
from jax.experimental import pallas as pl
from jax.experimental.pallas import tpu as pltpu


def _spe_kernel(x_ref, emb_ref, o_ref):
    # x_ref / o_ref: (bb, nb, TD)   lane-dense tile of the input / output
    # emb_ref:       (nb, TD)       pre-tiled vertex embedding (already x.dtype)
    o_ref[...] = x_ref[...] + emb_ref[...][None, :, :]


def spatial_positional_encoding(x, embedding_table, *, target_block_bytes=2 << 20):
    """
    x:               (B, N, T, D)
    embedding_table: (num_vertices, D), num_vertices >= N
    returns:         (B, N, T, D) in x.dtype
    """
    B, N, T, D = x.shape
    TD = T * D

    # Embedding lookup for arange(N) is the first N rows; cast once here and
    # tile along time so the kernel add is a plain lane-dense elementwise op.
    emb = embedding_table[:N, :].astype(x.dtype)
    emb_flat = jnp.tile(emb, (1, T))          # (N, TD); emb_flat[n, t*D+d] == emb[n, d]

    x_flat = x.reshape(B, N, TD)

    # Block sizing: biggest sublane-aligned chunk of N within the VMEM budget
    # (double-buffered inputs + outputs => ~4x block), then grow the batch
    # extent of the block to fill the remaining budget.
    itemsize = jnp.dtype(x.dtype).itemsize
    sublane = {4: 8, 2: 16, 1: 32}.get(itemsize, 8)
    row_bytes = TD * itemsize
    rows_budget = max(sublane, target_block_bytes // row_bytes)
    if rows_budget >= N:
        nb = N                                 # full-dim block: always legal
        bb = max(1, min(B, target_block_bytes // (N * row_bytes)))
    else:
        nb = max(sublane, (rows_budget // sublane) * sublane)
        bb = 1

    grid = (pl.cdiv(N, nb), pl.cdiv(B, bb))    # batch-block axis fastest:
                                               # emb block constant across it.

    out_flat = pl.pallas_call(
        _spe_kernel,
        out_shape=jax.ShapeDtypeStruct((B, N, TD), x.dtype),
        grid=grid,
        in_specs=[
            pl.BlockSpec((bb, nb, TD), lambda j, b: (b, j, 0)),
            # constant along b -> embedding tile is not re-fetched per batch step
            pl.BlockSpec((nb, TD), lambda j, b: (j, 0)),
        ],
        out_specs=pl.BlockSpec((bb, nb, TD), lambda j, b: (b, j, 0)),
        compiler_params=pltpu.CompilerParams(
            dimension_semantics=("parallel", "parallel"),
        ),
    )(x_flat, emb_flat)

    return out_flat.reshape(B, N, T, D)


def reference(x, embedding_table):
    N = x.shape[1]
    emb = embedding_table[:N, :]
    return x + emb[None, :, None, :]


if __name__ == "__main__":
    # Small shapes consistent with the module's forward:
    # batch=2, N (vertices)=16, T (timestamps)=8, d_model=32
    B, N, T, D = 2, 16, 8, 32
    num_of_vertices = N
    d_model = D
    dropout_p = 0.1  # unused in deterministic (eval) forward

    key = jax.random.PRNGKey(0)
    kx, ke = jax.random.split(key)

    x = jax.random.normal(kx, (B, N, T, D), dtype=jnp.float32)
    # Deterministic init of the Embedding weight (nn.Embedding default ~ N(0,1))
    embedding_table = jax.random.normal(
        ke, (num_of_vertices, d_model), dtype=jnp.float32
    )

    out = spatial_positional_encoding(x, embedding_table)
    out = jax.block_until_ready(out)

    ref = reference(x, embedding_table)
    assert out.shape == (B, N, T, D)
    assert jnp.allclose(out, ref, atol=1e-6, rtol=1e-6)

    print("KERNEL_OK")
</pallas_src>

<mosaic_0001>
module attributes {stable_mosaic.version = 11 : i64} {
  func.func @_spe_kernel(%arg0: i32, %arg1: i32, %arg2: memref<2x16x256xf32, #tpu.memory_space<vmem>>, %arg3: memref<16x256xf32, #tpu.memory_space<vmem>>, %arg4: memref<2x16x256xf32, #tpu.memory_space<vmem>>) attributes {dimension_semantics = [#tpu.dimension_semantics<parallel>, #tpu.dimension_semantics<parallel>], iteration_bounds = array<i64: 1, 1>, scalar_prefetch = 0 : i64, scratch_operands = 0 : i64, tpu.core_type = #tpu.core_type<tc>, window_params = [{transform_indices = @transform_0, window_bounds = array<i64: 2, 16, 256>}, {transform_indices = @transform_1, window_bounds = array<i64: 16, 256>}, {transform_indices = @transform_2, window_bounds = array<i64: 2, 16, 256>}]} {
    %c0 = arith.constant 0 : index
    %c0_0 = arith.constant 0 : index
    %c0_1 = arith.constant 0 : index
    %0 = vector.load %arg2[%c0, %c0_0, %c0_1] : memref<2x16x256xf32, #tpu.memory_space<vmem>>, vector<2x16x256xf32>
    %c0_2 = arith.constant 0 : index
    %c0_3 = arith.constant 0 : index
    %1 = vector.load %arg3[%c0_2, %c0_3] : memref<16x256xf32, #tpu.memory_space<vmem>>, vector<16x256xf32>
    %2 = vector.shape_cast %1 : vector<16x256xf32> to vector<1x16x256xf32>
    %3 = vector.broadcast %2 : vector<1x16x256xf32> to vector<2x16x256xf32>
    %4 = arith.addf %0, %3 : vector<2x16x256xf32>
    %c0_4 = arith.constant 0 : index
    %c0_5 = arith.constant 0 : index
    %c0_6 = arith.constant 0 : index
    %5 = vector.load %arg4[%c0_4, %c0_5, %c0_6] : memref<2x16x256xf32, #tpu.memory_space<vmem>>, vector<2x16x256xf32>
    tpu.vector_store %arg4[%c0_4, %c0_5, %c0_6], %4 {strides = array<i32>} : memref<2x16x256xf32, #tpu.memory_space<vmem>>, vector<2x16x256xf32>,
    return
  }
  func.func @transform_0(%arg0: i32, %arg1: i32) -> (i32, i32, i32) {
    %c0_i32 = arith.constant 0 : i32
    %c0_i32_0 = arith.constant 0 : i32
    return %arg1, %arg0, %c0_i32 : i32, i32, i32
  }
  func.func @transform_1(%arg0: i32, %arg1: i32) -> (i32, i32) {
    %c0_i32 = arith.constant 0 : i32
    %c0_i32_0 = arith.constant 0 : i32
    return %arg0, %c0_i32 : i32, i32
  }
  func.func @transform_2(%arg0: i32, %arg1: i32) -> (i32, i32, i32) {
    %c0_i32 = arith.constant 0 : i32
    %c0_i32_0 = arith.constant 0 : i32
    return %arg1, %arg0, %c0_i32 : i32, i32, i32
  }
}

</mosaic_0001>

<llo_original>
// kernel: tpu_custom_call.1
$region0: #{tpu_custom_call.1}
  #allocation0 [shape = 'u32[]', space=smem, size = 0x4, offset = 0x4, fixed_abs, tag = 'smem constant byte address 0x4 - core index']
  #allocation1 [shape = 'u32[144,128]{1,0:T(1,128)}', space=vmem, size = 0x12000, scoped, tag = 'internal scratch']
  %s0 = inlined_call_operand.hbm [shape: f32[2,16,256], index: 0, kind: input, shape index: {}]
  %s1 = inlined_call_operand.hbm [shape: f32[16,256], index: 1, kind: input, shape index: {}]
  %s2 = inlined_call_operand.hbm [shape: f32[2,16,256], index: 2, kind: output, shape index: {}]
  %s3 = sld [smem:[#allocation0]]
  $region26: #{tpu_custom_call.1} parent=0
    _
  %s5 = ssub.s32 1, %s3
  %s6 = scalar_select 0, %s5, %s3
  $region1: #{tpu_custom_call.1} parent=0
    #allocation2 [shape = 'u8[32768]{0}', space=vmem, size = 0x8000, scoped, tag = 'input window, operand 0, single buffered']
    #allocation3 [shape = 's32[1]{0}', space=sflag, size = 0x4, scoped, tag = 'scoped memory for tpu_custom_call.1']
    #allocation4 [shape = 's32[1]{0}', space=sflag, size = 0x4, scoped, tag = 'scoped memory for tpu_custom_call.1']
    #allocation5 [shape = 'u8[16384]{0}', space=vmem, size = 0x4000, scoped, tag = 'input window, operand 1, single buffered']
    #allocation6 [shape = 's32[1]{0}', space=sflag, size = 0x4, scoped, tag = 'scoped memory for tpu_custom_call.1']
    #allocation7 [shape = 'u8[32768]{0}', space=vmem, size = 0x8000, scoped, tag = 'output window, operand 0, single buffered']
    %7 = vsyncpa [#allocation3], 0
    %8 = vsyncpa [#allocation6], 0
    %9 = vsyncpa [#allocation4], 0
    // Predicated region
    $region2: #{tpu_custom_call.1} parent=1 // pred_check
      _
    $region3: #{tpu_custom_call.1} parent=1 // pred_check_branch
      %11 = sbr.rel (0) target = $region5
    $region4: #{tpu_custom_call.1} parent=1 // pred_region
      %s13 = ssub.s32 1024, 1024
      %14 = vsyncadd [#allocation3], %s13
      %s15 = sshll.u32 [#allocation2], 4
      %s16 = int_to_ptr.vmem [resolvable:$true] %s15
      %21 = dma.hbm_to_vmem [thread:$0]  %s0, 1024, %s16, [#allocation3], 256, 256, 16
    $region5: #{tpu_custom_call.1} parent=1 // pred_fallthru
      _
    // Predicated region
    $region6: #{tpu_custom_call.1} parent=1 // pred_check
      _
    $region7: #{tpu_custom_call.1} parent=1 // pred_check_branch
      %23 = sbr.rel (0) target = $region9
    $region8: #{tpu_custom_call.1} parent=1 // pred_region
      %s25 = ssub.s32 512, 512
      %26 = vsyncadd [#allocation6], %s25
      %s27 = sshll.u32 [#allocation5], 4
      %s28 = int_to_ptr.vmem [resolvable:$true] %s27
      %33 = dma.hbm_to_vmem [thread:$0]  %s1, 512, %s28, [#allocation6], 256, 256, 16
    $region9: #{tpu_custom_call.1} parent=1 // pred_fallthru
      _
    // Predicated region
    $region10: #{tpu_custom_call.1} parent=1 // pred_check
      _
    $region11: #{tpu_custom_call.1} parent=1 // pred_check_branch
      %35 = sbr.rel (0) target = $region13
    $region12: #{tpu_custom_call.1} parent=1 // pred_region
      %36 = dma.done [#allocation3], 1024
    $region13: #{tpu_custom_call.1} parent=1 // pred_fallthru
      _
    // Predicated region
    $region14: #{tpu_custom_call.1} parent=1 // pred_check
      _
    $region15: #{tpu_custom_call.1} parent=1 // pred_check_branch
      %38 = sbr.rel (0) target = $region17
    $region16: #{tpu_custom_call.1} parent=1 // pred_region
      %39 = dma.done [#allocation6], 512
    $region17: #{tpu_custom_call.1} parent=1 // pred_fallthru
      _
    %v40 = vld [vmem:[#allocation2] sm:$0xff]
    %v41 = vld [vmem:[#allocation2 + $0x8] sm:$0xff]
    %v42 = vld [vmem:[#allocation2 + $0x10] sm:$0xff]
    %v43 = vld [vmem:[#allocation2 + $0x18] sm:$0xff]
    %v44 = vld [vmem:[#allocation2 + $0x20] sm:$0xff]
    %v45 = vld [vmem:[#allocation2 + $0x28] sm:$0xff]
    %v46 = vld [vmem:[#allocation2 + $0x30] sm:$0xff]
    %v47 = vld [vmem:[#allocation2 + $0x38] sm:$0xff]
    %v48 = vld [vmem:[#allocation5] sm:$0xff]
    %v49 = vld [vmem:[#allocation5 + $0x8] sm:$0xff]
    %v50 = vld [vmem:[#allocation5 + $0x10] sm:$0xff]
    %v51 = vld [vmem:[#allocation5 + $0x18] sm:$0xff]
    %v52 = vadd.f32 %v40, %v48
    %v53 = vadd.f32 %v41, %v49
    %v54 = vadd.f32 %v42, %v50
    %v55 = vadd.f32 %v43, %v51
    %v56 = vadd.f32 %v44, %v48
    %v57 = vadd.f32 %v45, %v49
    %v58 = vadd.f32 %v46, %v50
    %v59 = vadd.f32 %v47, %v51
    %60 = vst [vmem:[#allocation7] sm:$0xff] %v52
    %61 = vst [vmem:[#allocation7 + $0x8] sm:$0xff] %v53
    %62 = vst [vmem:[#allocation7 + $0x10] sm:$0xff] %v54
    %63 = vst [vmem:[#allocation7 + $0x18] sm:$0xff] %v55
    %64 = vst [vmem:[#allocation7 + $0x20] sm:$0xff] %v56
    %65 = vst [vmem:[#allocation7 + $0x28] sm:$0xff] %v57
    %66 = vst [vmem:[#allocation7 + $0x30] sm:$0xff] %v58
    %67 = vst [vmem:[#allocation7 + $0x38] sm:$0xff] %v59
    // Predicated region
    $region18: #{tpu_custom_call.1} parent=1 // pred_check
      _
    $region19: #{tpu_custom_call.1} parent=1 // pred_check_branch
      %69 = sbr.rel (0) target = $region21
    $region20: #{tpu_custom_call.1} parent=1 // pred_region
      %s71 = ssub.s32 1024, 1024
      %72 = vsyncadd [#allocation4], %s71
      %s73 = sshll.u32 [#allocation7], 4
      %s74 = int_to_ptr.vmem [resolvable:$true] %s73
      %79 = dma.vmem_to_hbm [thread:$0]  %s74, 1024, %s2, [#allocation4], 256, 256, 16
    $region21: #{tpu_custom_call.1} parent=1 // pred_fallthru
      _
    // Predicated region
    $region22: #{tpu_custom_call.1} parent=1 // pred_check
      _
    $region23: #{tpu_custom_call.1} parent=1 // pred_check_branch
      %81 = sbr.rel (0) target = $region25
    $region24: #{tpu_custom_call.1} parent=1 // pred_region
      %82 = dma.done [#allocation4], 1024
    $region25: #{tpu_custom_call.1} parent=1 // pred_fallthru
      _
    %83 = vsyncpa [#allocation3], 1
    %84 = vsyncpa [#allocation6], 1
    %85 = vsyncpa [#allocation4], 1

</llo_original>
